<compile_context>
chip_gen: v6e
topology: v6e:2x2x1
jax: 0.10.0
libtpu: 0.0.40
codegen_flags: <defaults>
</compile_context>

<pallas_src>
import functools

import jax
import jax.numpy as jnp
import numpy as np
from jax.experimental import pallas as pl
from jax.experimental.pallas import tpu as pltpu

SMOOTH = 1e-08
LANES = 128
SUBLANES = 8
ROW_ALIGN = 16          # keeps block rows legal for bf16 (16,128) packing as well as f32
MAX_BLOCK_ROWS = 512    # 512*128*4 B = 256 KiB per input per pipeline buffer
NUM_CORES = 2           # v7x: 2 TensorCores; on v5e/v6e this is just an outer loop of 2


def _round_up(a, b):
    return ((a + b - 1) // b) * b


def _dice_bce_partial_kernel(x_ref, t_ref, inter_ref, sx_ref, st_ref, bce_ref, *,
                             rows, block_rows, blocks_per_core, apply_mask):
    """Accumulate per-core partial sums for intersection, sum(x), sum(t) and BCE."""
    c = pl.program_id(0)          # core / row-range split (parallel)
    i = pl.program_id(1)          # reduction steps within the core's range (arbitrary)

    # Output blocks stay VMEM-resident across the whole i axis for a given c:
    # zero them once, accumulate every step, Pallas writes them back when c changes.
    @pl.when(i == 0)
    def _():
        inter_ref[...] = jnp.zeros_like(inter_ref)
        sx_ref[...] = jnp.zeros_like(sx_ref)
        st_ref[...] = jnp.zeros_like(st_ref)
        bce_ref[...] = jnp.zeros_like(bce_ref)

    x = x_ref[...].astype(jnp.float32)     # (block_rows, 128)
    t = t_ref[...].astype(jnp.float32)

    if apply_mask:
        # Logical (unclamped) position of this block in the global row space.
        # Rows >= `rows` are either DMA-clipped garbage or redundant (clamped) re-reads;
        # zeroing both x and t makes them contribute exactly 0 to every sum below.
        row0 = (c * blocks_per_core + i) * block_rows
        rid = jax.lax.broadcasted_iota(jnp.int32, (block_rows, LANES), 0) + row0
        valid = rid < rows
        x = jnp.where(valid, x, 0.0)
        t = jnp.where(valid, t, 0.0)

    # Fold the block onto the natural (8,128) vreg tiling so the per-block reduction is
    # purely elementwise vreg adds (no per-step cross-lane/sublane XLU work).
    k = block_rows // SUBLANES
    x3 = x.reshape(k, SUBLANES, LANES)
    t3 = t.reshape(k, SUBLANES, LANES)

    # Matches torch BCE: log terms clamped to -100, so x=t=0 padding contributes 0.
    log_x = jnp.maximum(jnp.log(x3), -100.0)
    log_1mx = jnp.maximum(jnp.log(1.0 - x3), -100.0)
    bce = -(t3 * log_x + (1.0 - t3) * log_1mx)

    inter_ref[0] += jnp.sum(x3 * t3, axis=0)
    sx_ref[0] += jnp.sum(x3, axis=0)
    st_ref[0] += jnp.sum(t3, axis=0)
    bce_ref[0] += jnp.sum(bce, axis=0)


def dice_bce_loss(inputs, targets):
    """Pallas implementation of DiceBCELoss.forward(inputs, targets)."""
    assert inputs.shape == targets.shape
    n = int(np.prod(inputs.shape))
    assert n > 0

    x = inputs.reshape(-1)
    t = targets.reshape(-1)

    # Lane padding is only required when n is not a multiple of 128 (rare for
    # segmentation maps); the common case is a zero-copy reshape.
    rem = n % LANES
    if rem:
        pad = LANES - rem
        x = jnp.concatenate([x, jnp.zeros((pad,), x.dtype)])
        t = jnp.concatenate([t, jnp.zeros((pad,), t.dtype)])
    rows = (n + ((LANES - rem) % LANES)) // LANES

    x2 = x.reshape(rows, LANES)
    t2 = t.reshape(rows, LANES)

    block_rows = min(MAX_BLOCK_ROWS, _round_up(rows, ROW_ALIGN))
    total_blocks = pl.cdiv(rows, block_rows)
    blocks_per_core = pl.cdiv(total_blocks, NUM_CORES)
    # Mask needed whenever the (cores x blocks x block_rows) logical row space
    # overhangs the real row count (DMA-clipped tail and/or redundant clamped blocks).
    apply_mask = (NUM_CORES * blocks_per_core * block_rows) != rows

    def in_map(c, i):
        # Clamp so redundant trailing steps re-read an in-bounds block (mask zeroes them).
        return (jnp.minimum(c * blocks_per_core + i, total_blocks - 1), 0)

    def out_map(c, i):
        return (c, 0, 0)

    kernel = functools.partial(
        _dice_bce_partial_kernel,
        rows=rows, block_rows=block_rows,
        blocks_per_core=blocks_per_core, apply_mask=apply_mask)

    partial_shape = jax.ShapeDtypeStruct((NUM_CORES, SUBLANES, LANES), jnp.float32)
    out_spec = pl.BlockSpec((1, SUBLANES, LANES), out_map)

    in_bytes = int(x2.size) * x2.dtype.itemsize + int(t2.size) * t2.dtype.itemsize
    out_bytes = 4 * NUM_CORES * SUBLANES * LANES * 4
    cost = pl.CostEstimate(flops=10 * n, transcendentals=2 * n,
                           bytes_accessed=in_bytes + out_bytes)

    inter_p, sx_p, st_p, bce_p = pl.pallas_call(
        kernel,
        out_shape=(partial_shape,) * 4,
        grid_spec=pltpu.PrefetchScalarGridSpec(
            num_scalar_prefetch=0,
            grid=(NUM_CORES, blocks_per_core),
            in_specs=[
                pl.BlockSpec((block_rows, LANES), in_map),
                pl.BlockSpec((block_rows, LANES), in_map),
            ],
            out_specs=(out_spec,) * 4,
        ),
        compiler_params=pltpu.CompilerParams(
            dimension_semantics=("parallel", "arbitrary")),
        cost_estimate=cost,
    )(x2, t2)

    # Tiny final combine over 4 x (NUM_CORES, 8, 128) partials (negligible vs. streaming).
    inter = jnp.sum(inter_p)
    sx = jnp.sum(sx_p)
    st = jnp.sum(st_p)
    bce_sum = jnp.sum(bce_p)

    dice_loss = 1.0 - (2.0 * inter + SMOOTH) / (sx + st + SMOOTH)
    bce_mean = bce_sum / n                 # mean over the *original* element count
    return bce_mean + dice_loss


def _reference_loss(inputs, targets):
    xf = inputs.reshape(-1).astype(jnp.float32)
    tf = targets.reshape(-1).astype(jnp.float32)
    inter = jnp.sum(xf * tf)
    dice = 1.0 - (2.0 * inter + SMOOTH) / (jnp.sum(xf) + jnp.sum(tf) + SMOOTH)
    log_x = jnp.maximum(jnp.log(xf), -100.0)
    log_1mx = jnp.maximum(jnp.log(1.0 - xf), -100.0)
    bce = jnp.mean(-(tf * log_x + (1.0 - tf) * log_1mx))
    return bce + dice


if __name__ == "__main__":
    key = jax.random.PRNGKey(0)
    k1, k2 = jax.random.split(key)

    # Primary check: NCHW probabilities, as a segmentation head would produce.
    shape = (2, 4, 16, 16)
    inputs = jax.nn.sigmoid(jax.random.normal(k1, shape, dtype=jnp.float32))
    targets = jax.random.bernoulli(k2, p=0.3, shape=shape).astype(jnp.float32)

    loss = jax.block_until_ready(dice_bce_loss(inputs, targets))
    ref = jax.block_until_ready(_reference_loss(inputs, targets))
    assert np.allclose(np.asarray(loss), np.asarray(ref), rtol=1e-5, atol=1e-5), (
        f"pallas={loss} ref={ref}")

    # Secondary check: ragged size (n not a multiple of 128) exercising the lane-pad
    # fallback and the in-kernel tail mask / clamped-block path.
    shape2 = (2, 3, 7, 5)
    k3, k4 = jax.random.split(k1)
    inputs2 = jax.nn.sigmoid(jax.random.normal(k3, shape2, dtype=jnp.float32))
    targets2 = jax.random.bernoulli(k4, p=0.5, shape=shape2).astype(jnp.float32)

    loss2 = jax.block_until_ready(dice_bce_loss(inputs2, targets2))
    ref2 = jax.block_until_ready(_reference_loss(inputs2, targets2))
    assert np.allclose(np.asarray(loss2), np.asarray(ref2), rtol=1e-5, atol=1e-5), (
        f"pallas={loss2} ref={ref2}")

    print("KERNEL_OK")
</pallas_src>

<mosaic_0001>
module attributes {stable_mosaic.version = 11 : i64} {
  func.func @_dice_bce_partial_kernel(%arg0: i32, %arg1: i32, %arg2: memref<16x128xf32, #tpu.memory_space<vmem>>, %arg3: memref<16x128xf32, #tpu.memory_space<vmem>>, %arg4: memref<1x8x128xf32, #tpu.memory_space<vmem>>, %arg5: memref<1x8x128xf32, #tpu.memory_space<vmem>>, %arg6: memref<1x8x128xf32, #tpu.memory_space<vmem>>, %arg7: memref<1x8x128xf32, #tpu.memory_space<vmem>>) attributes {dimension_semantics = [#tpu.dimension_semantics<parallel>, #tpu.dimension_semantics<arbitrary>], iteration_bounds = array<i64: 2, 1>, scalar_prefetch = 0 : i64, scratch_operands = 0 : i64, tpu.core_type = #tpu.core_type<tc>, window_params = [{transform_indices = @transform_0, window_bounds = array<i64: 16, 128>}, {transform_indices = @transform_1, window_bounds = array<i64: 16, 128>}, {transform_indices = @transform_2, window_bounds = array<i64: 1, 8, 128>}, {transform_indices = @transform_3, window_bounds = array<i64: 1, 8, 128>}, {transform_indices = @transform_4, window_bounds = array<i64: 1, 8, 128>}, {transform_indices = @transform_5, window_bounds = array<i64: 1, 8, 128>}]} {
    %c0_i32 = arith.constant 0 : i32
    %0 = arith.cmpi eq, %arg1, %c0_i32 : i32
    %1 = arith.extui %0 : i1 to i32
    %c0_i32_0 = arith.constant 0 : i32
    %2 = arith.cmpi ne, %1, %c0_i32_0 : i32
    scf.if %2 {
      %cst_39 = arith.constant 0.000000e+00 : f32
      %63 = vector.broadcast %cst_39 : f32 to vector<1x8x128xf32>
      %c0_40 = arith.constant 0 : index
      %c0_41 = arith.constant 0 : index
      %c0_42 = arith.constant 0 : index
      %64 = vector.load %arg4[%c0_40, %c0_41, %c0_42] : memref<1x8x128xf32, #tpu.memory_space<vmem>>, vector<1x8x128xf32>
      tpu.vector_store %arg4[%c0_40, %c0_41, %c0_42], %63 {strides = array<i32>} : memref<1x8x128xf32, #tpu.memory_space<vmem>>, vector<1x8x128xf32>,
      %cst_43 = arith.constant 0.000000e+00 : f32
      %65 = vector.broadcast %cst_43 : f32 to vector<1x8x128xf32>
      %c0_44 = arith.constant 0 : index
      %c0_45 = arith.constant 0 : index
      %c0_46 = arith.constant 0 : index
      %66 = vector.load %arg5[%c0_44, %c0_45, %c0_46] : memref<1x8x128xf32, #tpu.memory_space<vmem>>, vector<1x8x128xf32>
      tpu.vector_store %arg5[%c0_44, %c0_45, %c0_46], %65 {strides = array<i32>} : memref<1x8x128xf32, #tpu.memory_space<vmem>>, vector<1x8x128xf32>,
      %cst_47 = arith.constant 0.000000e+00 : f32
      %67 = vector.broadcast %cst_47 : f32 to vector<1x8x128xf32>
      %c0_48 = arith.constant 0 : index
      %c0_49 = arith.constant 0 : index
      %c0_50 = arith.constant 0 : index
      %68 = vector.load %arg6[%c0_48, %c0_49, %c0_50] : memref<1x8x128xf32, #tpu.memory_space<vmem>>, vector<1x8x128xf32>
      tpu.vector_store %arg6[%c0_48, %c0_49, %c0_50], %67 {strides = array<i32>} : memref<1x8x128xf32, #tpu.memory_space<vmem>>, vector<1x8x128xf32>,
      %cst_51 = arith.constant 0.000000e+00 : f32
      %69 = vector.broadcast %cst_51 : f32 to vector<1x8x128xf32>
      %c0_52 = arith.constant 0 : index
      %c0_53 = arith.constant 0 : index
      %c0_54 = arith.constant 0 : index
      %70 = vector.load %arg7[%c0_52, %c0_53, %c0_54] : memref<1x8x128xf32, #tpu.memory_space<vmem>>, vector<1x8x128xf32>
      tpu.vector_store %arg7[%c0_52, %c0_53, %c0_54], %69 {strides = array<i32>} : memref<1x8x128xf32, #tpu.memory_space<vmem>>, vector<1x8x128xf32>,
    } else {
    }
    %c0 = arith.constant 0 : index
    %c0_1 = arith.constant 0 : index
    %3 = vector.load %arg2[%c0, %c0_1] : memref<16x128xf32, #tpu.memory_space<vmem>>, vector<16x128xf32>
    %c0_2 = arith.constant 0 : index
    %c0_3 = arith.constant 0 : index
    %4 = vector.load %arg3[%c0_2, %c0_3] : memref<16x128xf32, #tpu.memory_space<vmem>>, vector<16x128xf32>
    %c1_i32 = arith.constant 1 : i32
    %5 = arith.muli %arg0, %c1_i32 : i32
    %6 = arith.addi %5, %arg1 : i32
    %c16_i32 = arith.constant 16 : i32
    %7 = arith.muli %6, %c16_i32 : i32
    %8 = tpu.iota {dimensions = array<i32: 0>} : vector<16x128xi32>
    %9 = vector.broadcast %7 : i32 to vector<16x128xi32>
    %10 = arith.addi %8, %9 : vector<16x128xi32>
    %c16_i32_4 = arith.constant 16 : i32
    %11 = vector.broadcast %c16_i32_4 : i32 to vector<16x128xi32>
    %12 = arith.cmpi slt, %10, %11 : vector<16x128xi32>
    %cst = arith.constant 0.000000e+00 : f32
    %13 = vector.broadcast %cst : f32 to vector<16x128xf32>
    %14 = arith.select %12, %3, %13 : vector<16x128xi1>, vector<16x128xf32>
    %cst_5 = arith.constant 0.000000e+00 : f32
    %15 = vector.broadcast %cst_5 : f32 to vector<16x128xf32>
    %16 = arith.select %12, %4, %15 : vector<16x128xi1>, vector<16x128xf32>
    %17 = vector.shape_cast %14 : vector<16x128xf32> to vector<2x8x128xf32>
    %18 = vector.shape_cast %16 : vector<16x128xf32> to vector<2x8x128xf32>
    %19 = math.log %17 : vector<2x8x128xf32>
    %cst_6 = arith.constant -1.000000e+02 : f32
    %20 = vector.broadcast %cst_6 : f32 to vector<2x8x128xf32>
    %21 = arith.maximumf %19, %20 : vector<2x8x128xf32>
    %cst_7 = arith.constant 1.000000e+00 : f32
    %22 = vector.broadcast %cst_7 : f32 to vector<2x8x128xf32>
    %23 = arith.subf %22, %17 : vector<2x8x128xf32>
    %24 = math.log %23 : vector<2x8x128xf32>
    %cst_8 = arith.constant -1.000000e+02 : f32
    %25 = vector.broadcast %cst_8 : f32 to vector<2x8x128xf32>
    %26 = arith.maximumf %24, %25 : vector<2x8x128xf32>
    %27 = arith.mulf %18, %21 : vector<2x8x128xf32>
    %cst_9 = arith.constant 1.000000e+00 : f32
    %28 = vector.broadcast %cst_9 : f32 to vector<2x8x128xf32>
    %29 = arith.subf %28, %18 : vector<2x8x128xf32>
    %30 = arith.mulf %29, %26 : vector<2x8x128xf32>
    %31 = arith.addf %27, %30 : vector<2x8x128xf32>
    %cst_10 = arith.constant 0.000000e+00 : f32
    %32 = vector.broadcast %cst_10 : f32 to vector<2x8x128xf32>
    %33 = arith.subf %32, %31 : vector<2x8x128xf32>
    %c0_11 = arith.constant 0 : index
    %c0_12 = arith.constant 0 : index
    %c0_13 = arith.constant 0 : index
    %34 = vector.load %arg4[%c0_11, %c0_12, %c0_13] : memref<1x8x128xf32, #tpu.memory_space<vmem>>, vector<1x8x128xf32>
    %35 = vector.shape_cast %34 : vector<1x8x128xf32> to vector<8x128xf32>
    %36 = arith.mulf %17, %18 : vector<2x8x128xf32>
    %cst_14 = arith.constant dense<0.000000e+00> : vector<8x128xf32>
    %37 = vector.multi_reduction <add>, %36, %cst_14 [0] : vector<2x8x128xf32> to vector<8x128xf32>
    %38 = arith.addf %35, %37 : vector<8x128xf32>
    %c0_15 = arith.constant 0 : index
    %c0_16 = arith.constant 0 : index
    %c0_17 = arith.constant 0 : index
    %39 = vector.load %arg4[%c0_15, %c0_16, %c0_17] : memref<1x8x128xf32, #tpu.memory_space<vmem>>, vector<1x8x128xf32>
    %40 = vector.shape_cast %39 : vector<1x8x128xf32> to vector<8x128xf32>
    %41 = vector.shape_cast %38 : vector<8x128xf32> to vector<1x8x128xf32>
    tpu.vector_store %arg4[%c0_15, %c0_16, %c0_17], %41 {strides = array<i32>} : memref<1x8x128xf32, #tpu.memory_space<vmem>>, vector<1x8x128xf32>,
    %c0_18 = arith.constant 0 : index
    %c0_19 = arith.constant 0 : index
    %c0_20 = arith.constant 0 : index
    %42 = vector.load %arg5[%c0_18, %c0_19, %c0_20] : memref<1x8x128xf32, #tpu.memory_space<vmem>>, vector<1x8x128xf32>
    %43 = vector.shape_cast %42 : vector<1x8x128xf32> to vector<8x128xf32>
    %cst_21 = arith.constant dense<0.000000e+00> : vector<8x128xf32>
    %44 = vector.multi_reduction <add>, %17, %cst_21 [0] : vector<2x8x128xf32> to vector<8x128xf32>
    %45 = arith.addf %43, %44 : vector<8x128xf32>
    %c0_22 = arith.constant 0 : index
    %c0_23 = arith.constant 0 : index
    %c0_24 = arith.constant 0 : index
    %46 = vector.load %arg5[%c0_22, %c0_23, %c0_24] : memref<1x8x128xf32, #tpu.memory_space<vmem>>, vector<1x8x128xf32>
    %47 = vector.shape_cast %46 : vector<1x8x128xf32> to vector<8x128xf32>
    %48 = vector.shape_cast %45 : vector<8x128xf32> to vector<1x8x128xf32>
    tpu.vector_store %arg5[%c0_22, %c0_23, %c0_24], %48 {strides = array<i32>} : memref<1x8x128xf32, #tpu.memory_space<vmem>>, vector<1x8x128xf32>,
    %c0_25 = arith.constant 0 : index
    %c0_26 = arith.constant 0 : index
    %c0_27 = arith.constant 0 : index
    %49 = vector.load %arg6[%c0_25, %c0_26, %c0_27] : memref<1x8x128xf32, #tpu.memory_space<vmem>>, vector<1x8x128xf32>
    %50 = vector.shape_cast %49 : vector<1x8x128xf32> to vector<8x128xf32>
    %cst_28 = arith.constant dense<0.000000e+00> : vector<8x128xf32>
    %51 = vector.multi_reduction <add>, %18, %cst_28 [0] : vector<2x8x128xf32> to vector<8x128xf32>
    %52 = arith.addf %50, %51 : vector<8x128xf32>
    %c0_29 = arith.constant 0 : index
    %c0_30 = arith.constant 0 : index
    %c0_31 = arith.constant 0 : index
    %53 = vector.load %arg6[%c0_29, %c0_30, %c0_31] : memref<1x8x128xf32, #tpu.memory_space<vmem>>, vector<1x8x128xf32>
    %54 = vector.shape_cast %53 : vector<1x8x128xf32> to vector<8x128xf32>
    %55 = vector.shape_cast %52 : vector<8x128xf32> to vector<1x8x128xf32>
    tpu.vector_store %arg6[%c0_29, %c0_30, %c0_31], %55 {strides = array<i32>} : memref<1x8x128xf32, #tpu.memory_space<vmem>>, vector<1x8x128xf32>,
    %c0_32 = arith.constant 0 : index
    %c0_33 = arith.constant 0 : index
    %c0_34 = arith.constant 0 : index
    %56 = vector.load %arg7[%c0_32, %c0_33, %c0_34] : memref<1x8x128xf32, #tpu.memory_space<vmem>>, vector<1x8x128xf32>
    %57 = vector.shape_cast %56 : vector<1x8x128xf32> to vector<8x128xf32>
    %cst_35 = arith.constant dense<0.000000e+00> : vector<8x128xf32>
    %58 = vector.multi_reduction <add>, %33, %cst_35 [0] : vector<2x8x128xf32> to vector<8x128xf32>
    %59 = arith.addf %57, %58 : vector<8x128xf32>
    %c0_36 = arith.constant 0 : index
    %c0_37 = arith.constant 0 : index
    %c0_38 = arith.constant 0 : index
    %60 = vector.load %arg7[%c0_36, %c0_37, %c0_38] : memref<1x8x128xf32, #tpu.memory_space<vmem>>, vector<1x8x128xf32>
    %61 = vector.shape_cast %60 : vector<1x8x128xf32> to vector<8x128xf32>
    %62 = vector.shape_cast %59 : vector<8x128xf32> to vector<1x8x128xf32>
    tpu.vector_store %arg7[%c0_36, %c0_37, %c0_38], %62 {strides = array<i32>} : memref<1x8x128xf32, #tpu.memory_space<vmem>>, vector<1x8x128xf32>,
    return
  }
  func.func @transform_0(%arg0: i32, %arg1: i32) -> (i32, i32) {
    %c1_i32 = arith.constant 1 : i32
    %0 = arith.muli %arg0, %c1_i32 : i32
    %1 = arith.addi %0, %arg1 : i32
    %c0_i32 = arith.constant 0 : i32
    %2 = arith.minsi %1, %c0_i32 : i32
    %c0_i32_0 = arith.constant 0 : i32
    %c0_i32_1 = arith.constant 0 : i32
    return %2, %c0_i32_0 : i32, i32
  }
  func.func @transform_1(%arg0: i32, %arg1: i32) -> (i32, i32) {
    %c1_i32 = arith.constant 1 : i32
    %0 = arith.muli %arg0, %c1_i32 : i32
    %1 = arith.addi %0, %arg1 : i32
    %c0_i32 = arith.constant 0 : i32
    %2 = arith.minsi %1, %c0_i32 : i32
    %c0_i32_0 = arith.constant 0 : i32
    %c0_i32_1 = arith.constant 0 : i32
    return %2, %c0_i32_0 : i32, i32
  }
  func.func @transform_2(%arg0: i32, %arg1: i32) -> (i32, i32, i32) {
    %c0_i32 = arith.constant 0 : i32
    %c0_i32_0 = arith.constant 0 : i32
    %c0_i32_1 = arith.constant 0 : i32
    return %arg0, %c0_i32, %c0_i32_0 : i32, i32, i32
  }
  func.func @transform_3(%arg0: i32, %arg1: i32) -> (i32, i32, i32) {
    %c0_i32 = arith.constant 0 : i32
    %c0_i32_0 = arith.constant 0 : i32
    %c0_i32_1 = arith.constant 0 : i32
    return %arg0, %c0_i32, %c0_i32_0 : i32, i32, i32
  }
  func.func @transform_4(%arg0: i32, %arg1: i32) -> (i32, i32, i32) {
    %c0_i32 = arith.constant 0 : i32
    %c0_i32_0 = arith.constant 0 : i32
    %c0_i32_1 = arith.constant 0 : i32
    return %arg0, %c0_i32, %c0_i32_0 : i32, i32, i32
  }
  func.func @transform_5(%arg0: i32, %arg1: i32) -> (i32, i32, i32) {
    %c0_i32 = arith.constant 0 : i32
    %c0_i32_0 = arith.constant 0 : i32
    %c0_i32_1 = arith.constant 0 : i32
    return %arg0, %c0_i32, %c0_i32_0 : i32, i32, i32
  }
}

</mosaic_0001>

<llo_original>
// kernel: tpu_custom_call.1
$region0: #{tpu_custom_call.1}
  #allocation0 [shape = 'u32[]', space=smem, size = 0x4, offset = 0x4, fixed_abs, tag = 'smem constant byte address 0x4 - core index']
  #allocation1 [shape = 'u32[144,128]{1,0:T(1,128)}', space=vmem, size = 0x12000, scoped, tag = 'internal scratch']
  %s0 = inlined_call_operand.hbm [shape: f32[16,128], index: 0, kind: input, shape index: {}]
  %s1 = inlined_call_operand.hbm [shape: f32[16,128], index: 1, kind: input, shape index: {}]
  %s2 = inlined_call_operand.hbm [shape: f32[2,8,128], index: 2, kind: output, shape index: {0}]
  %s3 = inlined_call_operand.hbm [shape: f32[2,8,128], index: 3, kind: output, shape index: {1}]
  %s4 = inlined_call_operand.hbm [shape: f32[2,8,128], index: 4, kind: output, shape index: {2}]
  %s5 = inlined_call_operand.hbm [shape: f32[2,8,128], index: 5, kind: output, shape index: {3}]
  %6 = xla_tuple %s2, %s3, %s4, %s5
  %s7 = sld [smem:[#allocation0]]
  $region77: #{tpu_custom_call.1} parent=0
    _
  %s9 = ssub.s32 1, %s7
  %s10 = scalar_select 0, %s9, %s7
  $region1: #{tpu_custom_call.1} parent=0
    #allocation2 [shape = 'u8[16384]{0}', space=vmem, size = 0x4000, scoped, tag = 'input window, operand 0']
    #allocation3 [shape = 's32[2]{0}', space=sflag, size = 0x8, scoped, tag = 'scoped memory for tpu_custom_call.1']
    #allocation4 [shape = 's32[2]{0}', space=sflag, size = 0x8, scoped, tag = 'scoped memory for tpu_custom_call.1']
    #allocation5 [shape = 'u8[16384]{0}', space=vmem, size = 0x4000, scoped, tag = 'input window, operand 1']
    #allocation6 [shape = 's32[2]{0}', space=sflag, size = 0x8, scoped, tag = 'scoped memory for tpu_custom_call.1']
    #allocation7 [shape = 'u8[8192]{0}', space=vmem, size = 0x2000, scoped, tag = 'output window, operand 0']
    #allocation8 [shape = 'u8[8192]{0}', space=vmem, size = 0x2000, scoped, tag = 'output window, operand 1']
    #allocation9 [shape = 's32[2]{0}', space=sflag, size = 0x8, scoped, tag = 'scoped memory for tpu_custom_call.1']
    #allocation10 [shape = 'u8[8192]{0}', space=vmem, size = 0x2000, scoped, tag = 'output window, operand 2']
    #allocation11 [shape = 'u8[8192]{0}', space=vmem, size = 0x2000, scoped, tag = 'output window, operand 3']
    #allocation12 [shape = 's32[2]{0}', space=sflag, size = 0x8, scoped, tag = 'scoped memory for tpu_custom_call.1']
    %11 = vsyncpa [#allocation3], 0
    %s12 = scalar_lea.sflag [#allocation3], 1
    %13 = vsyncpa %s12, 0
    %14 = vsyncpa [#allocation6], 0
    %s15 = scalar_lea.sflag [#allocation6], 1
    %16 = vsyncpa %s15, 0
    %17 = vsyncpa [#allocation4], 0
    %s18 = scalar_lea.sflag [#allocation4], 1
    %19 = vsyncpa %s18, 0
    %20 = vsyncpa [#allocation9], 0
    %s21 = scalar_lea.sflag [#allocation9], 1
    %22 = vsyncpa %s21, 0
    %23 = vsyncpa [#allocation12], 0
    %s24 = scalar_lea.sflag [#allocation12], 1
    %25 = vsyncpa %s24, 0
    loop: start=0, step=1, limit=4
    $region2: #{tpu_custom_call.1} parent=1 // loop_pre_header
      _
    $region3: #{tpu_custom_call.1} parent=1 // loop_header
      %s27 = sphi 0, %s31
      %p28 = scmp.ge.s32.totalorder %s27, 4
      %s34 = sphi 0, %s46
      %s35 = sphi 0, %s42
      %s36 = sphi 0, %s34
      %s37 = sphi 0, %s35
      %s38 = sphi 0, %s36
      %s39 = sphi 0, %s37
      %s55 = sphi 0, %s57
      %s58 = sphi 0, %s55
      %s59 = sphi 0, %s58
      %s75 = sphi 0, %s59
      %s87 = sphi 0, %s89
      %s90 = sphi 0, %s87
      %s91 = sphi 0, %s90
      %s107 = sphi 0, %s91
      %s113 = sphi 0, %s115
      %s116 = sphi 0, %s113
      %s117 = sphi 0, %s116
      %s133 = sphi 0, %s117
      %s139 = sphi 0, %s141
      %s142 = sphi 0, %s139
      %s143 = sphi 0, %s142
      %s159 = sphi 0, %s143
      %s165 = sphi 0, %s167
      %s168 = sphi 0, %s165
      %s169 = sphi 0, %s168
      %s185 = sphi 0, %s169
      %s191 = sphi 0, %s193
      %s194 = sphi 0, %s191
      %s195 = sphi 0, %s194
      %s211 = sphi 0, %s195
    $region4: #{tpu_custom_call.1} parent=1 // loop_header_branch
      %30 = sbr.rel (%p28) target = $region8
    $region5: #{tpu_custom_call.1} parent=1 // loop_body
      %s32 = ssub.s32 %s27, 1
      %s33 = ssub.s32 %s27, 2
      %s40 = sadd.s32 1, %s35
      %p41 = scmp.ge.s32.totalorder %s40, 1
      %s42 = scalar_select %p41, 0, %s40
      %s43 = sadd.s32 1, %s34
      %s44 = scalar_select %p41, %s43, %s34
      %p45 = scmp.ge.s32.totalorder %s44, 2
      %s46 = scalar_select %p45, 0, %s44
      %s47 = sadd.s32 %s34, %s35
      %p48 = scmp.lt.s32.totalorder %s47, 0
      %s49 = scalar_select %p48, %s47, 0
      %s50 = sadd.s32 %s46, %s42
      %p51 = scmp.lt.s32.totalorder %s50, 0
      %s52 = scalar_select %p51, %s50, 0
      %s53 = ssub.s32 %s49, %s52
      %p54 = scmp.eq.s32.totalorder %s53, 0
      %s56 = sadd.s32 %s55, 1
      %s57 = scalar_select %p54, %s55, %s56
      %p60 = pneg %p54
      %p61 = scmp.eq.s32.totalorder %s27, 1
      %p62 = por %p60, %p61
      %p63 = scmp.ne.s32.totalorder %s55, %s58
      %p64 = scmp.eq.s32.totalorder %s27, 0
      %p65 = por %p63, %p64
      %p66 = scmp.ne.s32.totalorder %s55, %s58
      %p67 = scmp.eq.s32.totalorder %s32, 1
      %p68 = por %p66, %p67
      %p69 = scmp.ne.s32.totalorder %s58, %s59
      %p70 = scmp.eq.s32.totalorder %s32, 0
      %p71 = por %p69, %p70
      %p72 = scmp.ne.s32.totalorder %s58, %s59
      %p73 = scmp.eq.s32.totalorder %s33, 1
      %p74 = por %p72, %p73
      %p76 = scmp.ne.s32.totalorder %s59, %s75
      %p77 = scmp.eq.s32.totalorder %s33, 0
      %p78 = por %p76, %p77
      %s79 = sadd.s32 %s34, %s35
      %p80 = scmp.lt.s32.totalorder %s79, 0
      %s81 = scalar_select %p80, %s79, 0
      %s82 = sadd.s32 %s46, %s42
      %p83 = scmp.lt.s32.totalorder %s82, 0
      %s84 = scalar_select %p83, %s82, 0
      %s85 = ssub.s32 %s81, %s84
      %p86 = scmp.eq.s32.totalorder %s85, 0
      %s88 = sadd.s32 %s87, 1
      %s89 = scalar_select %p86, %s87, %s88
      %p92 = pneg %p86
      %p93 = scmp.eq.s32.totalorder %s27, 1
      %p94 = por %p92, %p93
      %p95 = scmp.ne.s32.totalorder %s87, %s90
      %p96 = scmp.eq.s32.totalorder %s27, 0
      %p97 = por %p95, %p96
      %p98 = scmp.ne.s32.totalorder %s87, %s90
      %p99 = scmp.eq.s32.totalorder %s32, 1
      %p100 = por %p98, %p99
      %p101 = scmp.ne.s32.totalorder %s90, %s91
      %p102 = scmp.eq.s32.totalorder %s32, 0
      %p103 = por %p101, %p102
      %p104 = scmp.ne.s32.totalorder %s90, %s91
      %p105 = scmp.eq.s32.totalorder %s33, 1
      %p106 = por %p104, %p105
      %p108 = scmp.ne.s32.totalorder %s91, %s107
      %p109 = scmp.eq.s32.totalorder %s33, 0
      %p110 = por %p108, %p109
      %s111 = ssub.s32 %s34, %s46
      %p112 = scmp.eq.s32.totalorder %s111, 0
      %s114 = sadd.s32 %s113, 1
      %s115 = scalar_select %p112, %s113, %s114
      %p118 = pneg %p112
      %p119 = scmp.eq.s32.totalorder %s27, 1
      %p120 = por %p118, %p119
      %p121 = scmp.ne.s32.totalorder %s113, %s116
      %p122 = scmp.eq.s32.totalorder %s27, 0
      %p123 = por %p121, %p122
      %p124 = scmp.ne.s32.totalorder %s113, %s116
      %p125 = scmp.eq.s32.totalorder %s32, 1
      %p126 = por %p124, %p125
      %p127 = scmp.ne.s32.totalorder %s116, %s117
      %p128 = scmp.eq.s32.totalorder %s32, 0
      %p129 = por %p127, %p128
      %p130 = scmp.ne.s32.totalorder %s116, %s117
      %p131 = scmp.eq.s32.totalorder %s33, 1
      %p132 = por %p130, %p131
      %p134 = scmp.ne.s32.totalorder %s117, %s133
      %p135 = scmp.eq.s32.totalorder %s33, 0
      %p136 = por %p134, %p135
      %s137 = ssub.s32 %s34, %s46
      %p138 = scmp.eq.s32.totalorder %s137, 0
      %s140 = sadd.s32 %s139, 1
      %s141 = scalar_select %p138, %s139, %s140
      %p144 = pneg %p138
      %p145 = scmp.eq.s32.totalorder %s27, 1
      %p146 = por %p144, %p145
      %p147 = scmp.ne.s32.totalorder %s139, %s142
      %p148 = scmp.eq.s32.totalorder %s27, 0
      %p149 = por %p147, %p148
      %p150 = scmp.ne.s32.totalorder %s139, %s142
      %p151 = scmp.eq.s32.totalorder %s32, 1
      %p152 = por %p150, %p151
      %p153 = scmp.ne.s32.totalorder %s142, %s143
      %p154 = scmp.eq.s32.totalorder %s32, 0
      %p155 = por %p153, %p154
      %p156 = scmp.ne.s32.totalorder %s142, %s143
      %p157 = scmp.eq.s32.totalorder %s33, 1
      %p158 = por %p156, %p157
      %p160 = scmp.ne.s32.totalorder %s143, %s159
      %p161 = scmp.eq.s32.totalorder %s33, 0
      %p162 = por %p160, %p161
      %s163 = ssub.s32 %s34, %s46
      %p164 = scmp.eq.s32.totalorder %s163, 0
      %s166 = sadd.s32 %s165, 1
      %s167 = scalar_select %p164, %s165, %s166
      %p170 = pneg %p164
      %p171 = scmp.eq.s32.totalorder %s27, 1
      %p172 = por %p170, %p171
      %p173 = scmp.ne.s32.totalorder %s165, %s168
      %p174 = scmp.eq.s32.totalorder %s27, 0
      %p175 = por %p173, %p174
      %p176 = scmp.ne.s32.totalorder %s165, %s168
      %p177 = scmp.eq.s32.totalorder %s32, 1
      %p178 = por %p176, %p177
      %p179 = scmp.ne.s32.totalorder %s168, %s169
      %p180 = scmp.eq.s32.totalorder %s32, 0
      %p181 = por %p179, %p180
      %p182 = scmp.ne.s32.totalorder %s168, %s169
      %p183 = scmp.eq.s32.totalorder %s33, 1
      %p184 = por %p182, %p183
      %p186 = scmp.ne.s32.totalorder %s169, %s185
      %p187 = scmp.eq.s32.totalorder %s33, 0
      %p188 = por %p186, %p187
      %s189 = ssub.s32 %s34, %s46
      %p190 = scmp.eq.s32.totalorder %s189, 0
      %s192 = sadd.s32 %s191, 1
      %s193 = scalar_select %p190, %s191, %s192
      %p196 = pneg %p190
      %p197 = scmp.eq.s32.totalorder %s27, 1
      %p198 = por %p196, %p197
      %p199 = scmp.ne.s32.totalorder %s191, %s194
      %p200 = scmp.eq.s32.totalorder %s27, 0
      %p201 = por %p199, %p200
      %p202 = scmp.ne.s32.totalorder %s191, %s194
      %p203 = scmp.eq.s32.totalorder %s32, 1
      %p204 = por %p202, %p203
      %p205 = scmp.ne.s32.totalorder %s194, %s195
      %p206 = scmp.eq.s32.totalorder %s32, 0
      %p207 = por %p205, %p206
      %p208 = scmp.ne.s32.totalorder %s194, %s195
      %p209 = scmp.eq.s32.totalorder %s33, 1
      %p210 = por %p208, %p209
      %p212 = scmp.ne.s32.totalorder %s195, %s211
      %p213 = scmp.eq.s32.totalorder %s33, 0
      %p214 = por %p212, %p213
      %p215 = scmp.le.s32.totalorder 1, %s27
      %p216 = scmp.lt.s32.totalorder %s27, 3
      %p217 = pnand %p215, %p216
      %p218 = pneg %p217
      // Predicated region
      $region9: #{tpu_custom_call.1} parent=5 // pred_check
        _
      $region10: #{tpu_custom_call.1} parent=5 // pred_check_branch
        %220 = sbr.rel (%p217) target = $region12
      $region11: #{tpu_custom_call.1} parent=5 // pred_region
        %s221 = ssub.s32 %s27, 1
      $region12: #{tpu_custom_call.1} parent=5 // pred_fallthru
        _
      %p222 = scmp.lt.s32.totalorder %s27, 2
      // Predicated region
      $region13: #{tpu_custom_call.1} parent=5 // pred_check
        %p223 = pneg %p222
      $region14: #{tpu_custom_call.1} parent=5 // pred_check_branch
        %225 = sbr.rel (%p223) target = $region16
      $region15: #{tpu_custom_call.1} parent=5 // pred_region
        // Predicated region
        $region17: #{tpu_custom_call.1} parent=15 // pred_check
          %p226 = pneg %p65
        $region18: #{tpu_custom_call.1} parent=15 // pred_check_branch
          %228 = sbr.rel (%p226) target = $region20
        $region19: #{tpu_custom_call.1} parent=15 // pred_region
          %s229 = sand.u32 %s55, 1
          %s230 = scalar_lea.sflag [#allocation3], %s229
          %s231 = sand.u32 %s55, 1
          %s232 = smul.addr %s231, 16
          %s233 = scalar_lea.vmem [#allocation2], %s232
          %s234 = sadd.s32 %s34, %s35
          %p235 = scmp.lt.s32.totalorder %s234, 0
          %s236 = scalar_select %p235, %s234, 0
          %s237 = smul.u32 2, %s236
          %s239 = ssub.s32 256, 256
          %240 = vsyncadd %s230, %s239
          %s241 = smul.addr %s237, 128
          %s242 = scalar_lea.hbm %s0, %s241
          %s243 = sshll.u32 %s233, 4
          %s244 = int_to_ptr.vmem [resolvable:$true] %s243
          %249 = dma.hbm_to_vmem [thread:$0]  %s242, 256, %s244, %s230, 128, 128, 8
        $region20: #{tpu_custom_call.1} parent=15 // pred_fallthru
          _
        // Predicated region
        $region21: #{tpu_custom_call.1} parent=15 // pred_check
          %p250 = pneg %p97
        $region22: #{tpu_custom_call.1} parent=15 // pred_check_branch
          %252 = sbr.rel (%p250) target = $region24
        $region23: #{tpu_custom_call.1} parent=15 // pred_region
          %s253 = sand.u32 %s87, 1
          %s254 = scalar_lea.sflag [#allocation6], %s253
          %s255 = sand.u32 %s87, 1
          %s256 = smul.addr %s255, 16
          %s257 = scalar_lea.vmem [#allocation5], %s256
          %s258 = sadd.s32 %s34, %s35
          %p259 = scmp.lt.s32.totalorder %s258, 0
          %s260 = scalar_select %p259, %s258, 0
          %s261 = smul.u32 2, %s260
          %s263 = ssub.s32 256, 256
          %264 = vsyncadd %s254, %s263
          %s265 = smul.addr %s261, 128
          %s266 = scalar_lea.hbm %s1, %s265
          %s267 = sshll.u32 %s257, 4
          %s268 = int_to_ptr.vmem [resolvable:$true] %s267
          %273 = dma.hbm_to_vmem [thread:$0]  %s266, 256, %s268, %s254, 128, 128, 8
        $region24: #{tpu_custom_call.1} parent=15 // pred_fallthru
          _
      $region16: #{tpu_custom_call.1} parent=5 // pred_fallthru
        _
      %p274 = scmp.le.s32.totalorder 1, %s27
      %p275 = scmp.lt.s32.totalorder %s27, 3
      %p276 = pnand %p274, %p275
      %p277 = pneg %p276
      // Predicated region
      $region25: #{tpu_custom_call.1} parent=5 // pred_check
        _
      $region26: #{tpu_custom_call.1} parent=5 // pred_check_branch
        %279 = sbr.rel (%p276) target = $region28
      $region27: #{tpu_custom_call.1} parent=5 // pred_region
        %s280 = ssub.s32 %s27, 1
        %s281 = sand.u32 %s58, 1
        %s282 = scalar_lea.sflag [#allocation3], %s281
        %s283 = sand.u32 %s58, 1
        %s284 = smul.addr %s283, 16
        %s285 = scalar_lea.vmem [#allocation2], %s284
        // Predicated region
        $region29: #{tpu_custom_call.1} parent=27 // pred_check
          %p286 = pneg %p71
        $region30: #{tpu_custom_call.1} parent=27 // pred_check_branch
          %288 = sbr.rel (%p286) target = $region32
        $region31: #{tpu_custom_call.1} parent=27 // pred_region
          %289 = dma.done %s282, 256
        $region32: #{tpu_custom_call.1} parent=27 // pred_fallthru
          _
        %s290 = sand.u32 %s90, 1
        %s291 = scalar_lea.sflag [#allocation6], %s290
        %s292 = sand.u32 %s90, 1
        %s293 = smul.addr %s292, 16
        %s294 = scalar_lea.vmem [#allocation5], %s293
        // Predicated region
        $region33: #{tpu_custom_call.1} parent=27 // pred_check
          %p295 = pneg %p103
        $region34: #{tpu_custom_call.1} parent=27 // pred_check_branch
          %297 = sbr.rel (%p295) target = $region36
        $region35: #{tpu_custom_call.1} parent=27 // pred_region
          %298 = dma.done %s291, 256
        $region36: #{tpu_custom_call.1} parent=27 // pred_fallthru
          _
        %s299 = sand.u32 %s58, 1
        %s300 = scalar_lea.sflag [#allocation3], %s299
        %s301 = sand.u32 %s58, 1
        %s302 = smul.addr %s301, 16
        %s303 = scalar_lea.vmem [#allocation2], %s302
        %p304 = pneg %p71
        %p305 = pneg %p68
        %s306 = sand.u32 %s90, 1
        %s307 = scalar_lea.sflag [#allocation6], %s306
        %s308 = sand.u32 %s90, 1
        %s309 = smul.addr %s308, 16
        %s310 = scalar_lea.vmem [#allocation5], %s309
        %p311 = pneg %p103
        %p312 = pneg %p100
        %p313 = pneg %p129
        %p314 = pneg %p126
        %s315 = sand.u32 %s116, 1
        %s316 = scalar_lea.sflag [#allocation4], %s315
        %s317 = sand.u32 %s116, 1
        %s318 = smul.addr %s317, 8
        %s319 = scalar_lea.vmem [#allocation7], %s318
        %p320 = pneg %p155
        %p321 = pneg %p152
        %s322 = sand.u32 %s32, 1
        %s323 = scalar_lea.sflag [#allocation9], %s322
        %s324 = sand.u32 %s142, 1
        %s325 = smul.addr %s324, 8
        %s326 = scalar_lea.vmem [#allocation8], %s325
        %p327 = pneg %p181
        %p328 = pneg %p178
        %s329 = sand.u32 %s32, 1
        %s330 = scalar_lea.sflag [#allocation9], %s329
        %s331 = sand.u32 %s168, 1
        %s332 = smul.addr %s331, 8
        %s333 = scalar_lea.vmem [#allocation10], %s332
        %p334 = pneg %p207
        %p335 = pneg %p204
        %s336 = sand.u32 %s194, 1
        %s337 = scalar_lea.sflag [#allocation12], %s336
        %s338 = sand.u32 %s194, 1
        %s339 = smul.addr %s338, 8
        %s340 = scalar_lea.vmem [#allocation11], %s339
        %s341 = sadd.s32 %s36, %s37
        %p342 = scmp.lt.s32.totalorder %s341, 0
        %s343 = scalar_select %p342, %s341, 0
        %s344 = smul.u32 2, %s343
        %s345 = sadd.s32 %s36, %s37
        %p346 = scmp.lt.s32.totalorder %s345, 0
        %s347 = scalar_select %p346, %s345, 0
        %s348 = smul.u32 2, %s347
        %p349 = scmp.eq.s32.totalorder %s37, 0
        // Predicated region
        $region37: #{tpu_custom_call.1} parent=27 // pred_check
          %p350 = pneg %p349
        $region38: #{tpu_custom_call.1} parent=27 // pred_check_branch
          %352 = sbr.rel (%p350) target = $region40
        $region39: #{tpu_custom_call.1} parent=27 // pred_region
          %353 = vst [vmem:[%s319] sm:$0xff] 0.0
          %354 = vst [vmem:[%s326] sm:$0xff] 0.0
          %355 = vst [vmem:[%s333] sm:$0xff] 0.0
          %356 = vst [vmem:[%s340] sm:$0xff] 0.0
        $region40: #{tpu_custom_call.1} parent=27 // pred_fallthru
          _
        %v357 = vld [vmem:[%s285] sm:$0xff]
        %v358 = vld [vmem:[%s285 + $0x8] sm:$0xff]
        %v359 = vld [vmem:[%s294] sm:$0xff]
        %v360 = vld [vmem:[%s294 + $0x8] sm:$0xff]
        %s361 = sadd.s32 %s36, %s37
        %s362 = smul.u32 %s361, 16
        %v363 = vlaneseq
        %v364 = vshrl.u32 %v363, 7
        %v365 = vadd.s32 %v364, 8
        %v366 = vstv %s362
        %v367 = vadd.s32 %v364, %v366
        %v368 = vadd.s32 %v365, %v366
        %vm369 = vcmp.lt.s32.totalorder %v367, 16
        %vm370 = vcmp.lt.s32.totalorder %v368, 16
        %v371 = vsel %vm369, %v357, 0.0
        %v372 = vsel %vm370, %v358, 0.0
        %v373 = vsel %vm369, %v359, 0.0
        %v374 = vsel %vm370, %v360, 0.0
        %v375 = vlog2.pop %v371
        %v376 = vmul.f32 %v375, 0.6931472
        %v377 = vlog2.pop %v372
        %v378 = vmul.f32 %v377, 0.6931472
        %v379 = vmax.f32 %v376, -100.0
        %v380 = vmax.f32 %v378, -100.0
        %v381 = vsub.f32 1.0, %v371
        %v382 = vsub.f32 1.0, %v372
        %v383 = vlog2.pop %v381
        %v384 = vmul.f32 %v383, 0.6931472
        %v385 = vlog2.pop %v382
        %v386 = vmul.f32 %v385, 0.6931472
        %v387 = vmax.f32 %v384, -100.0
        %v388 = vmax.f32 %v386, -100.0
        %v389 = vmul.f32 %v373, %v379
        %v390 = vmul.f32 %v374, %v380
        %v391 = vsub.f32 1.0, %v373
        %v392 = vsub.f32 1.0, %v374
        %v393 = vmul.f32 %v391, %v387
        %v394 = vmul.f32 %v392, %v388
        %v395 = vadd.f32 %v389, %v393
        %v396 = vadd.f32 %v390, %v394
        %v397 = vsub.f32 0.0, %v395
        %v398 = vsub.f32 0.0, %v396
        %v399 = vld [vmem:[%s319] sm:$0xff]
        %v400 = vmul.f32 %v371, %v373
        %v401 = vmul.f32 %v372, %v374
        %v402 = vadd.f32 %v400, %v401
        %v403 = vadd.f32 %v399, %v402
        %404 = vst [vmem:[%s319] sm:$0xff] %v403
        %v405 = vld [vmem:[%s326] sm:$0xff]
        %v406 = vadd.f32 %v371, %v372
        %v407 = vadd.f32 %v405, %v406
        %408 = vst [vmem:[%s326] sm:$0xff] %v407
        %v409 = vld [vmem:[%s333] sm:$0xff]
        %v410 = vadd.f32 %v373, %v374
        %v411 = vadd.f32 %v409, %v410
        %412 = vst [vmem:[%s333] sm:$0xff] %v411
        %v413 = vld [vmem:[%s340] sm:$0xff]
        %v414 = vadd.f32 %v397, %v398
        %v415 = vadd.f32 %v413, %v414
        %416 = vst [vmem:[%s340] sm:$0xff] %v415
        %s417 = sand.u32 %s116, 1
        %s418 = scalar_lea.sflag [#allocation4], %s417
        %s419 = sand.u32 %s116, 1
        %s420 = smul.addr %s419, 8
        %s421 = scalar_lea.vmem [#allocation7], %s420
        %s422 = sand.u32 %s32, 1
        %s423 = scalar_lea.sflag [#allocation9], %s422
        %s424 = sand.u32 %s142, 1
        %s425 = smul.addr %s424, 8
        %s426 = scalar_lea.vmem [#allocation8], %s425
        %s427 = sand.u32 %s32, 1
        %s428 = scalar_lea.sflag [#allocation9], %s427
        %s429 = sand.u32 %s168, 1
        %s430 = smul.addr %s429, 8
        %s431 = scalar_lea.vmem [#allocation10], %s430
        %s432 = sand.u32 %s194, 1
        %s433 = scalar_lea.sflag [#allocation12], %s432
        %s434 = sand.u32 %s194, 1
        %s435 = smul.addr %s434, 8
        %s436 = scalar_lea.vmem [#allocation11], %s435
        // Predicated region
        $region41: #{tpu_custom_call.1} parent=27 // pred_check
          %p437 = pneg %p126
        $region42: #{tpu_custom_call.1} parent=27 // pred_check_branch
          %439 = sbr.rel (%p437) target = $region44
        $region43: #{tpu_custom_call.1} parent=27 // pred_region
          %s441 = ssub.s32 128, 128
          %442 = vsyncadd %s418, %s441
          %s443 = smul.addr %s36, 128
          %s444 = scalar_lea.hbm %s2, %s443
          %s446 = sshll.u32 %s421, 4
          %s447 = int_to_ptr.vmem [resolvable:$true] %s446
          %449 = dma.vmem_to_hbm [thread:$0]  %s447, 128, %s444, %s418
        $region44: #{tpu_custom_call.1} parent=27 // pred_fallthru
          _
        // Predicated region
        $region45: #{tpu_custom_call.1} parent=27 // pred_check
          %p450 = pneg %p152
        $region46: #{tpu_custom_call.1} parent=27 // pred_check_branch
          %452 = sbr.rel (%p450) target = $region48
        $region47: #{tpu_custom_call.1} parent=27 // pred_region
          %s454 = ssub.s32 128, 128
          %455 = vsyncadd %s423, %s454
          %s456 = smul.addr %s36, 128
          %s457 = scalar_lea.hbm %s3, %s456
          %s459 = sshll.u32 %s426, 4
          %s460 = int_to_ptr.vmem [resolvable:$true] %s459
          %462 = dma.vmem_to_hbm [thread:$0]  %s460, 128, %s457, %s423
        $region48: #{tpu_custom_call.1} parent=27 // pred_fallthru
          _
        // Predicated region
        $region49: #{tpu_custom_call.1} parent=27 // pred_check
          %p463 = pneg %p178
        $region50: #{tpu_custom_call.1} parent=27 // pred_check_branch
          %465 = sbr.rel (%p463) target = $region52
        $region51: #{tpu_custom_call.1} parent=27 // pred_region
          %s467 = ssub.s32 128, 128
          %468 = vsyncadd %s428, %s467
          %s469 = smul.addr %s36, 128
          %s470 = scalar_lea.hbm %s4, %s469
          %s472 = sshll.u32 %s431, 4
          %s473 = int_to_ptr.vmem [resolvable:$true] %s472
          %475 = dma.vmem_to_hbm [thread:$0]  %s473, 128, %s470, %s428
        $region52: #{tpu_custom_call.1} parent=27 // pred_fallthru
          _
        // Predicated region
        $region53: #{tpu_custom_call.1} parent=27 // pred_check
          %p476 = pneg %p204
        $region54: #{tpu_custom_call.1} parent=27 // pred_check_branch
          %478 = sbr.rel (%p476) target = $region56
        $region55: #{tpu_custom_call.1} parent=27 // pred_region
          %s480 = ssub.s32 128, 128
          %481 = vsyncadd %s433, %s480
          %s482 = smul.addr %s36, 128
          %s483 = scalar_lea.hbm %s5, %s482
          %s485 = sshll.u32 %s436, 4
          %s486 = int_to_ptr.vmem [resolvable:$true] %s485
          %488 = dma.vmem_to_hbm [thread:$0]  %s486, 128, %s483, %s433
        $region56: #{tpu_custom_call.1} parent=27 // pred_fallthru
          _
      $region28: #{tpu_custom_call.1} parent=5 // pred_fallthru
        _
      %p489 = scmp.le.s32.totalorder 2, %s27
      // Predicated region
      $region57: #{tpu_custom_call.1} parent=5 // pred_check
        %p490 = pneg %p489
      $region58: #{tpu_custom_call.1} parent=5 // pred_check_branch
        %492 = sbr.rel (%p490) target = $region60
      $region59: #{tpu_custom_call.1} parent=5 // pred_region
        %s493 = ssub.s32 %s27, 2
        // Predicated region
        $region61: #{tpu_custom_call.1} parent=59 // pred_check
          %p494 = pneg %p132
        $region62: #{tpu_custom_call.1} parent=59 // pred_check_branch
          %496 = sbr.rel (%p494) target = $region64
        $region63: #{tpu_custom_call.1} parent=59 // pred_region
          %s497 = sand.u32 %s117, 1
          %s498 = scalar_lea.sflag [#allocation4], %s497
          %s499 = sand.u32 %s117, 1
          %s500 = smul.addr %s499, 8
          %s501 = scalar_lea.vmem [#allocation7], %s500
          %502 = dma.done %s498, 128
        $region64: #{tpu_custom_call.1} parent=59 // pred_fallthru
          _
        // Predicated region
        $region65: #{tpu_custom_call.1} parent=59 // pred_check
          %p503 = pneg %p158
        $region66: #{tpu_custom_call.1} parent=59 // pred_check_branch
          %505 = sbr.rel (%p503) target = $region68
        $region67: #{tpu_custom_call.1} parent=59 // pred_region
          %s506 = sand.u32 %s33, 1
          %s507 = scalar_lea.sflag [#allocation9], %s506
          %s508 = sand.u32 %s143, 1
          %s509 = smul.addr %s508, 8
          %s510 = scalar_lea.vmem [#allocation8], %s509
          %511 = dma.done %s507, 128
        $region68: #{tpu_custom_call.1} parent=59 // pred_fallthru
          _
        // Predicated region
        $region69: #{tpu_custom_call.1} parent=59 // pred_check
          %p512 = pneg %p184
        $region70: #{tpu_custom_call.1} parent=59 // pred_check_branch
          %514 = sbr.rel (%p512) target = $region72
        $region71: #{tpu_custom_call.1} parent=59 // pred_region
          %s515 = sand.u32 %s33, 1
          %s516 = scalar_lea.sflag [#allocation9], %s515
          %s517 = sand.u32 %s169, 1
          %s518 = smul.addr %s517, 8
          %s519 = scalar_lea.vmem [#allocation10], %s518
          %520 = dma.done %s516, 128
        $region72: #{tpu_custom_call.1} parent=59 // pred_fallthru
          _
        // Predicated region
        $region73: #{tpu_custom_call.1} parent=59 // pred_check
          %p521 = pneg %p210
        $region74: #{tpu_custom_call.1} parent=59 // pred_check_branch
          %523 = sbr.rel (%p521) target = $region76
        $region75: #{tpu_custom_call.1} parent=59 // pred_region
          %s524 = sand.u32 %s195, 1
          %s525 = scalar_lea.sflag [#allocation12], %s524
          %s526 = sand.u32 %s195, 1
          %s527 = smul.addr %s526, 8
          %s528 = scalar_lea.vmem [#allocation11], %s527
          %529 = dma.done %s525, 128
        $region76: #{tpu_custom_call.1} parent=59 // pred_fallthru
          _
      $region60: #{tpu_custom_call.1} parent=5 // pred_fallthru
        _
    $region6: #{tpu_custom_call.1} parent=1 // loop_footer
      %s31 = sadd.s32 1, %s27
    $region7: #{tpu_custom_call.1} parent=1 // loop_footer_branch
      %26 = sbr.rel target = $region3
    $region8: #{tpu_custom_call.1} parent=1 // loop_exit
      _
    %530 = vsyncpa [#allocation3], 1
    %s531 = scalar_lea.sflag [#allocation3], 1
    %532 = vsyncpa %s531, 1
    %533 = vsyncpa [#allocation6], 1
    %s534 = scalar_lea.sflag [#allocation6], 1
    %535 = vsyncpa %s534, 1
    %536 = vsyncpa [#allocation4], 1
    %s537 = scalar_lea.sflag [#allocation4], 1
    %538 = vsyncpa %s537, 1
    %539 = vsyncpa [#allocation9], 1
    %s540 = scalar_lea.sflag [#allocation9], 1
    %541 = vsyncpa %s540, 1
    %542 = vsyncpa [#allocation12], 1
    %s543 = scalar_lea.sflag [#allocation12], 1
    %544 = vsyncpa %s543, 1

</llo_original>
